<compile_context>
chip_gen: v7x
topology: tpu7x:2x2x1
jax: 0.10.0
libtpu: 0.0.40
codegen_flags: <defaults>
</compile_context>

<pallas_src>
import jax
import jax.numpy as jnp
from jax import lax
from jax.experimental import pallas as pl
from jax.experimental.pallas import tpu as pltpu


def _round_up(a, b):
    return ((a + b - 1) // b) * b


def _flownet_kernel(z_ref, w1_ref, b1_ref, w2_ref, b2_ref, o_ref):
    # z: (TB, d_in)            input tile (f32 or bf16)
    # w1: (d_in, Hp)           resident layer-1 weights (same dtype as z)
    # b1: (1, Hp)  f32         resident layer-1 bias
    # w2: (1, Hp)  f32         resident layer-2 weights as a row
    # b2: (1,)     f32 (SMEM)  layer-2 bias scalar
    # o:  (1, TB)  f32         lane-dense output row
    h = jnp.dot(z_ref[...], w1_ref[...], preferred_element_type=jnp.float32)
    h = jnp.maximum(h + b1_ref[...], 0.0)                      # bias + ReLU (f32)
    # Second layer on the MXU: contract Hp of (1,Hp) with Hp of (TB,Hp),
    # producing a lane-dense (1, TB) row (q@k^T-style last-dim contraction).
    f = lax.dot_general(
        w2_ref[...], h,
        dimension_numbers=(((1,), (1,)), ((), ())),
        preferred_element_type=jnp.float32,
    )                                                           # (1, TB)
    o_ref[...] = (f + b2_ref[0]).astype(o_ref.dtype)


def flownet_forward(x, y, w1, b1, w2, b2, *, batch_tile=8192,
                    input_dtype=jnp.float32):
    """Pallas-backed forward of FlowNet: returns shape (B,) flow values."""
    B, d_x = x.shape
    By, d_y = y.shape
    assert By == B
    d_in, hidden = w1.shape
    assert d_in == d_x + d_y

    # --- parameter prep (zero padding of Hp keeps the math exact under ReLU) ---
    Hp = _round_up(max(hidden, 128), 128)
    pad_h = Hp - hidden
    w1p = jnp.pad(w1, ((0, 0), (0, pad_h))).astype(input_dtype)          # (d_in, Hp)
    b1p = jnp.pad(jnp.reshape(b1, (1, hidden)),
                  ((0, 0), (0, pad_h))).astype(jnp.float32)              # (1, Hp)
    w2row = jnp.pad(jnp.reshape(w2, (1, hidden)),
                    ((0, 0), (0, pad_h))).astype(jnp.float32)            # (1, Hp)
    b2s = jnp.reshape(b2, (1,)).astype(jnp.float32)                      # (1,) SMEM

    # --- batch tiling: big lane-aligned tiles; >=2 grid steps when possible ---
    tile_cap = _round_up(max(int(batch_tile), 128), 128)
    B128 = _round_up(B, 128)
    # Split the batch into at least two tiles whenever it spans more than one
    # 128-row tile, so the "parallel" grid axis shards over both v7x TCs.
    TB = max(128, min(tile_cap, _round_up((B128 + 1) // 2, 128)))
    B_pad = _round_up(B, TB)
    G = B_pad // TB

    # --- fuse torch.cat once in the wrapper; single (TB, d_in) stream ---
    z = jnp.concatenate([x, y], axis=-1).astype(input_dtype)
    if B_pad != B:
        z = jnp.pad(z, ((0, B_pad - B), (0, 0)))

    # --- VMEM budget: keep double-buffering even for big tiles (v5e default
    #     scope is only 16 MiB); never ask for more than v7x's 64 MiB physical.
    in_itemsize = jnp.dtype(input_dtype).itemsize
    est_vmem = (2 * TB * 128 * in_itemsize        # lane-padded z tile, 2 buffers
                + 3 * TB * Hp * 4                 # h + elementwise temps (f32)
                + 2 * TB * 4                      # (1, TB) out tile, 2 buffers
                + 4 * (d_in + 2) * Hp * 4)        # resident weight/bias blocks
    vmem_limit = int(min(64 * 1024 * 1024, max(32 * 1024 * 1024, 2 * est_vmem)))

    cost = pl.CostEstimate(
        flops=2 * B_pad * d_in * Hp + 2 * B_pad * Hp,
        transcendentals=0,
        bytes_accessed=int(z.size * jnp.dtype(input_dtype).itemsize
                           + w1p.size * jnp.dtype(input_dtype).itemsize
                           + (b1p.size + w2row.size + 1 + B_pad) * 4),
    )

    out2d = pl.pallas_call(
        _flownet_kernel,
        out_shape=jax.ShapeDtypeStruct((G, TB), jnp.float32),
        grid=(G,),
        in_specs=[
            pl.BlockSpec((TB, d_in), lambda i: (i, 0)),          # z tile
            pl.BlockSpec((d_in, Hp), lambda i: (0, 0)),          # W1 (resident)
            pl.BlockSpec((1, Hp), lambda i: (0, 0)),             # b1 (resident)
            pl.BlockSpec((1, Hp), lambda i: (0, 0)),             # W2 row (resident)
            pl.BlockSpec(memory_space=pltpu.MemorySpace.SMEM),   # b2 scalar
        ],
        out_specs=pl.BlockSpec((1, TB), lambda i: (i, 0)),       # lane-dense row
        compiler_params=pltpu.CompilerParams(
            dimension_semantics=("parallel",),
            vmem_limit_bytes=vmem_limit),
        cost_estimate=cost,
    )(z, w1p, b1p, w2row, b2s)

    return out2d.reshape(-1)[:B]                                 # squeeze(-1)


def init_params(d_x, d_y, hidden, key):
    """Deterministic synthetic parameters (shapes match nn.Linear layers)."""
    d_in = d_x + d_y
    k1, k2, k3, k4 = jax.random.split(key, 4)
    s1 = 1.0 / jnp.sqrt(d_in)
    s2 = 1.0 / jnp.sqrt(hidden)
    w1 = jax.random.uniform(k1, (d_in, hidden), jnp.float32, -s1, s1)
    b1 = jax.random.uniform(k2, (1, hidden), jnp.float32, -s1, s1)
    w2 = jax.random.uniform(k3, (hidden, 1), jnp.float32, -s2, s2)
    b2 = jax.random.uniform(k4, (1, 1), jnp.float32, -s2, s2)
    return w1, b1, w2, b2


def reference_forward(x, y, w1, b1, w2, b2):
    z = jnp.concatenate([x, y], axis=-1)
    h = jnp.maximum(z @ w1 + jnp.reshape(b1, (1, -1)), 0.0)
    return (h @ jnp.reshape(w2, (-1, 1)) + jnp.reshape(b2, (1, 1)))[:, 0]


if __name__ == "__main__":
    key = jax.random.PRNGKey(0)
    kx, ky, kp, kx2, ky2 = jax.random.split(key, 5)

    # Small demo shapes (single grid step).
    B, d_x, d_y, hidden = 8, 6, 2, 64
    x = jax.random.normal(kx, (B, d_x), jnp.float32)
    y = jax.random.normal(ky, (B, d_y), jnp.float32)
    w1, b1, w2, b2 = init_params(d_x, d_y, hidden, kp)

    out = jax.block_until_ready(flownet_forward(x, y, w1, b1, w2, b2))
    ref = reference_forward(x, y, w1, b1, w2, b2)
    assert out.shape == (B,)
    assert jnp.allclose(out, ref, atol=2e-5, rtol=2e-5)

    # Multi-step pipelined grid (>= 2 "parallel" steps) + batch padding path.
    B2 = 300
    x2 = jax.random.normal(kx2, (B2, d_x), jnp.float32)
    y2 = jax.random.normal(ky2, (B2, d_y), jnp.float32)
    out2 = jax.block_until_ready(
        flownet_forward(x2, y2, w1, b1, w2, b2, batch_tile=128))
    ref2 = reference_forward(x2, y2, w1, b1, w2, b2)
    assert out2.shape == (B2,)
    assert jnp.allclose(out2, ref2, atol=2e-5, rtol=2e-5)

    # Optional bf16 streaming path (f32 accumulation) -- looser tolerance.
    out3 = jax.block_until_ready(
        flownet_forward(x2, y2, w1, b1, w2, b2, input_dtype=jnp.bfloat16))
    assert out3.shape == (B2,)
    assert jnp.allclose(out3, ref2, atol=5e-2, rtol=5e-2)

    print("KERNEL_OK")
</pallas_src>

<mosaic_0001>
module attributes {stable_mosaic.version = 11 : i64} {
  func.func @_flownet_kernel(%arg0: i32, %arg1: memref<128x8xf32, #tpu.memory_space<vmem>>, %arg2: memref<8x128xf32, #tpu.memory_space<vmem>>, %arg3: memref<1x128xf32, #tpu.memory_space<vmem>>, %arg4: memref<1x128xf32, #tpu.memory_space<vmem>>, %arg5: memref<1xf32, #tpu.memory_space<smem>>, %arg6: memref<1x128xf32, #tpu.memory_space<vmem>>) attributes {dimension_semantics = [#tpu.dimension_semantics<parallel>], iteration_bounds = array<i64: 1>, scalar_prefetch = 0 : i64, scratch_operands = 0 : i64, tpu.core_type = #tpu.core_type<tc>, window_params = [{transform_indices = @transform_0, window_bounds = array<i64: 128, 8>}, {pipeline_mode = #tpu.pipeline_mode<synchronous>, transform_indices = @transform_1, window_bounds = array<i64: 8, 128>}, {pipeline_mode = #tpu.pipeline_mode<synchronous>, transform_indices = @transform_2, window_bounds = array<i64: 1, 128>}, {pipeline_mode = #tpu.pipeline_mode<synchronous>, transform_indices = @transform_3, window_bounds = array<i64: 1, 128>}, {transform_indices = @transform_4, window_bounds = array<i64: 1>}, {transform_indices = @transform_5, window_bounds = array<i64: 1, 128>}]} {
    %c0 = arith.constant 0 : index
    %c0_0 = arith.constant 0 : index
    %0 = vector.load %arg1[%c0, %c0_0] : memref<128x8xf32, #tpu.memory_space<vmem>>, vector<128x8xf32>
    %c0_1 = arith.constant 0 : index
    %c0_2 = arith.constant 0 : index
    %1 = vector.load %arg2[%c0_1, %c0_2] : memref<8x128xf32, #tpu.memory_space<vmem>>, vector<8x128xf32>
    %cst = arith.constant dense<0.000000e+00> : vector<128x128xf32>
    %2 = tpu.matmul %0, %1, %cst {dimension_numbers = #tpu.dot_dimension_numbers<[1], [0], [0], [1], [0, 0, 1, 1], [], []>} : vector<128x8xf32>, vector<8x128xf32>, vector<128x128xf32> -> vector<128x128xf32>
    %c0_3 = arith.constant 0 : index
    %c0_4 = arith.constant 0 : index
    %3 = vector.load %arg3[%c0_3, %c0_4] : memref<1x128xf32, #tpu.memory_space<vmem>>, vector<1x128xf32>
    %4 = vector.broadcast %3 : vector<1x128xf32> to vector<128x128xf32>
    %5 = arith.addf %2, %4 : vector<128x128xf32>
    %cst_5 = arith.constant 0.000000e+00 : f32
    %6 = vector.broadcast %cst_5 : f32 to vector<128x128xf32>
    %7 = arith.maximumf %5, %6 : vector<128x128xf32>
    %c0_6 = arith.constant 0 : index
    %c0_7 = arith.constant 0 : index
    %8 = vector.load %arg4[%c0_6, %c0_7] : memref<1x128xf32, #tpu.memory_space<vmem>>, vector<1x128xf32>
    %cst_8 = arith.constant dense<0.000000e+00> : vector<1x128xf32>
    %9 = tpu.matmul %8, %7, %cst_8 {dimension_numbers = #tpu.dot_dimension_numbers<[1], [1], [0], [0], [0, 0, 1, 0], [], []>} : vector<1x128xf32>, vector<128x128xf32>, vector<1x128xf32> -> vector<1x128xf32>
    %c0_9 = arith.constant 0 : index
    %10 = memref.load %arg5[%c0_9] : memref<1xf32, #tpu.memory_space<smem>>
    %11 = vector.broadcast %10 : f32 to vector<1x128xf32>
    %12 = arith.addf %9, %11 : vector<1x128xf32>
    %c0_10 = arith.constant 0 : index
    %c0_11 = arith.constant 0 : index
    %13 = vector.load %arg6[%c0_10, %c0_11] : memref<1x128xf32, #tpu.memory_space<vmem>>, vector<1x128xf32>
    tpu.vector_store %arg6[%c0_10, %c0_11], %12 {strides = array<i32>} : memref<1x128xf32, #tpu.memory_space<vmem>>, vector<1x128xf32>,
    return
  }
  func.func @transform_0(%arg0: i32) -> (i32, i32) {
    %c0_i32 = arith.constant 0 : i32
    %c0_i32_0 = arith.constant 0 : i32
    return %arg0, %c0_i32 : i32, i32
  }
  func.func @transform_1(%arg0: i32) -> (i32, i32) {
    %c0_i32 = arith.constant 0 : i32
    %c0_i32_0 = arith.constant 0 : i32
    %c0_i32_1 = arith.constant 0 : i32
    return %c0_i32, %c0_i32_0 : i32, i32
  }
  func.func @transform_2(%arg0: i32) -> (i32, i32) {
    %c0_i32 = arith.constant 0 : i32
    %c0_i32_0 = arith.constant 0 : i32
    %c0_i32_1 = arith.constant 0 : i32
    return %c0_i32, %c0_i32_0 : i32, i32
  }
  func.func @transform_3(%arg0: i32) -> (i32, i32) {
    %c0_i32 = arith.constant 0 : i32
    %c0_i32_0 = arith.constant 0 : i32
    %c0_i32_1 = arith.constant 0 : i32
    return %c0_i32, %c0_i32_0 : i32, i32
  }
  func.func @transform_4(%arg0: i32) -> i32 {
    %c0_i32 = arith.constant 0 : i32
    %c0_i32_0 = arith.constant 0 : i32
    return %c0_i32 : i32
  }
  func.func @transform_5(%arg0: i32) -> (i32, i32) {
    %c0_i32 = arith.constant 0 : i32
    %c0_i32_0 = arith.constant 0 : i32
    return %arg0, %c0_i32 : i32, i32
  }
}

</mosaic_0001>

<llo_original>
// kernel: tpu_custom_call.1
$region0: #{tpu_custom_call.1}
  #allocation0 [shape = 'u32[]', space=smem, size = 0x4, offset = 0x4, fixed_abs, tag = 'smem constant byte address 0x4 - core index']
  #allocation1 [shape = 'u32[144,128]{1,0:T(1,128)}', space=vmem, size = 0x12000, scoped, tag = 'internal scratch']
  #allocation2 [shape = 'f32[1]{0:T(128)S(6)}', space=smem, size = 0x200, scoped, tag = 'scoped memory for tpu_custom_call.1']
  %s0 = inlined_call_operand.vmem [shape: f32[128,8], index: 0, kind: input, shape index: {}]
  %s1 = inlined_call_operand.vmem [shape: f32[8,128], index: 1, kind: input, shape index: {}]
  %s2 = inlined_call_operand.vmem [shape: f32[1,128], index: 2, kind: input, shape index: {}]
  %s3 = inlined_call_operand.vmem [shape: f32[1,128], index: 3, kind: input, shape index: {}]
  %s4 = inlined_call_operand.<no memory space> [shape: f32[1], index: 4, kind: input, shape index: {}]
  %s5 = inlined_call_operand.hbm [shape: f32[1,128], index: 5, kind: output, shape index: {}]
  %s6 = sld [smem:[#allocation0]]
  $region30: #{tpu_custom_call.1} parent=0
    _
  %s8 = ssub.s32 1, %s6
  %s9 = scalar_select 0, %s8, %s6
  %10 = sst [smem:[#allocation2]] %s4
  $region1: #{tpu_custom_call.1} parent=0
    #allocation3 [shape = 'u8[512]{0}', space=vmem, size = 0x400, scoped, tag = 'output window, operand 0, single buffered']
    #allocation4 [shape = 's32[1]{0}', space=sflag, size = 0x4, scoped, tag = 'scoped memory for tpu_custom_call.1']
    %11 = vsyncpa [#allocation4], 0
    // Predicated region
    $region2: #{tpu_custom_call.1} parent=1 // pred_check
      _
    $region3: #{tpu_custom_call.1} parent=1 // pred_check_branch
      %13 = sbr.rel (0) target = $region5
    $region4: #{tpu_custom_call.1} parent=1 // pred_region
      _
    $region5: #{tpu_custom_call.1} parent=1 // pred_fallthru
      _
    // Predicated region
    $region6: #{tpu_custom_call.1} parent=1 // pred_check
      _
    $region7: #{tpu_custom_call.1} parent=1 // pred_check_branch
      %15 = sbr.rel (0) target = $region9
    $region8: #{tpu_custom_call.1} parent=1 // pred_region
      _
    $region9: #{tpu_custom_call.1} parent=1 // pred_fallthru
      _
    // Predicated region
    $region10: #{tpu_custom_call.1} parent=1 // pred_check
      _
    $region11: #{tpu_custom_call.1} parent=1 // pred_check_branch
      %17 = sbr.rel (0) target = $region13
    $region12: #{tpu_custom_call.1} parent=1 // pred_region
      _
    $region13: #{tpu_custom_call.1} parent=1 // pred_fallthru
      _
    // Predicated region
    $region14: #{tpu_custom_call.1} parent=1 // pred_check
      _
    $region15: #{tpu_custom_call.1} parent=1 // pred_check_branch
      %19 = sbr.rel (0) target = $region17
    $region16: #{tpu_custom_call.1} parent=1 // pred_region
      _
    $region17: #{tpu_custom_call.1} parent=1 // pred_fallthru
      _
    // Predicated region
    $region18: #{tpu_custom_call.1} parent=1 // pred_check
      _
    $region19: #{tpu_custom_call.1} parent=1 // pred_check_branch
      %21 = sbr.rel (0) target = $region21
    $region20: #{tpu_custom_call.1} parent=1 // pred_region
      _
    $region21: #{tpu_custom_call.1} parent=1 // pred_fallthru
      _
    %v22 = vld [vmem:[%s0] sm:$0xff]
    %v23 = vld [vmem:[%s0 + $0x8] sm:$0xff]
    %v24 = vld [vmem:[%s0 + $0x10] sm:$0xff]
    %v25 = vld [vmem:[%s0 + $0x18] sm:$0xff]
    %v26 = vld [vmem:[%s0 + $0x20] sm:$0xff]
    %v27 = vld [vmem:[%s0 + $0x28] sm:$0xff]
    %v28 = vld [vmem:[%s0 + $0x30] sm:$0xff]
    %v29 = vld [vmem:[%s0 + $0x38] sm:$0xff]
    %v30 = vld [vmem:[%s0 + $0x40] sm:$0xff]
    %v31 = vld [vmem:[%s0 + $0x48] sm:$0xff]
    %v32 = vld [vmem:[%s0 + $0x50] sm:$0xff]
    %v33 = vld [vmem:[%s0 + $0x58] sm:$0xff]
    %v34 = vld [vmem:[%s0 + $0x60] sm:$0xff]
    %v35 = vld [vmem:[%s0 + $0x68] sm:$0xff]
    %v36 = vld [vmem:[%s0 + $0x70] sm:$0xff]
    %v37 = vld [vmem:[%s0 + $0x78] sm:$0xff]
    %v38 = vld [vmem:[%s1] sm:$0xff]
    %v39 = vld [vmem:[%s2] sm:$0x1]
    %v41 = vlaneseq
    %v42 = vshrl.u32 %v41, 7
    %v43 = vsub.s32 0, %v42
    %v44 = vrot.slane %v39, %v43
    %vm46 = vcmask 64512
    %v48 = vsel %vm46, %v22, 0
    %v51 = vsel %vm46, %v23, 0
    %v54 = vsel %vm46, %v24, 0
    %v57 = vsel %vm46, %v25, 0
    %v60 = vsel %vm46, %v26, 0
    %v63 = vsel %vm46, %v27, 0
    %v66 = vsel %vm46, %v28, 0
    %v69 = vsel %vm46, %v29, 0
    %v72 = vsel %vm46, %v30, 0
    %v75 = vsel %vm46, %v31, 0
    %v78 = vsel %vm46, %v32, 0
    %v81 = vsel %vm46, %v33, 0
    %v84 = vsel %vm46, %v34, 0
    %v87 = vsel %vm46, %v35, 0
    %v90 = vsel %vm46, %v36, 0
    %v93 = vsel %vm46, %v37, 0
    %95 = vmatprep.subr.mxu0 0.0
    %96 = vmatpush1.msra.mxu0 %v38
    %97 = vmatprep.subr.mxu0 0.0
    %98 = vmatpush1.msra.mxu0 0.0
    %99 = vmatprep.subr.mxu0 0.0
    %100 = vmatpush1.msra.mxu0 0.0
    %101 = vmatprep.subr.mxu0 0.0
    %102 = vmatpush1.msra.mxu0 0.0
    %103 = vmatprep.subr.mxu0 0.0
    %104 = vmatpush1.msra.mxu0 0.0
    %105 = vmatprep.subr.mxu0 0.0
    %106 = vmatpush1.msra.mxu0 0.0
    %107 = vmatprep.subr.mxu0 0.0
    %108 = vmatpush1.msra.mxu0 0.0
    %109 = vmatprep.subr.mxu0 0.0
    %110 = vmatpush1.msra.mxu0 0.0
    %111 = vmatprep.subr.mxu0 0.0
    %112 = vmatpush1.msra.mxu0 0.0
    %113 = vmatprep.subr.mxu0 0.0
    %114 = vmatpush1.msra.mxu0 0.0
    %115 = vmatprep.subr.mxu0 0.0
    %116 = vmatpush1.msra.mxu0 0.0
    %117 = vmatprep.subr.mxu0 0.0
    %118 = vmatpush1.msra.mxu0 0.0
    %119 = vmatprep.subr.mxu0 0.0
    %120 = vmatpush1.msra.mxu0 0.0
    %121 = vmatprep.subr.mxu0 0.0
    %122 = vmatpush1.msra.mxu0 0.0
    %123 = vmatprep.subr.mxu0 0.0
    %124 = vmatpush1.msra.mxu0 0.0
    %125 = vmatprep.subr.mxu0 0.0
    %126 = vmatpush1.msra.mxu0 0.0
    %127 = vmatprep.subr.mxu0 0.0
    %128 = vmatpush1.msra.mxu0 0.0
    %129 = vmatprep.subr.mxu0 0.0
    %130 = vmatpush1.msra.mxu0 0.0
    %131 = vmatprep.subr.mxu0 0.0
    %132 = vmatpush1.msra.mxu0 0.0
    %133 = vmatprep.subr.mxu0 0.0
    %134 = vmatpush1.msra.mxu0 0.0
    %135 = vmatprep.subr.mxu0 0.0
    %136 = vmatpush1.msra.mxu0 0.0
    %137 = vmatprep.subr.mxu0 0.0
    %138 = vmatpush1.msra.mxu0 0.0
    %139 = vmatprep.subr.mxu0 0.0
    %140 = vmatpush1.msra.mxu0 0.0
    %141 = vmatprep.subr.mxu0 0.0
    %142 = vmatpush1.msra.mxu0 0.0
    %143 = vmatprep.subr.mxu0 0.0
    %144 = vmatpush1.msra.mxu0 0.0
    %145 = vmatprep.subr.mxu0 0.0
    %146 = vmatpush1.msra.mxu0 0.0
    %147 = vmatprep.subr.mxu0 0.0
    %148 = vmatpush1.msra.mxu0 0.0
    %149 = vmatprep.subr.mxu0 0.0
    %150 = vmatpush1.msra.mxu0 0.0
    %151 = vmatprep.subr.mxu0 0.0
    %152 = vmatpush1.msra.mxu0 0.0
    %153 = vmatprep.subr.mxu0 0.0
    %154 = vmatpush1.msra.mxu0 0.0
    %155 = vmatprep.subr.mxu0 0.0
    %156 = vmatpush1.msra.mxu0 0.0
    %157 = vmatprep.subr.mxu0 0.0
    %158 = vmatpush1.msra.mxu0 0.0
    %159 = vmatprep.mubr.f32.mxu0 0.0
    %160 = vmatmul.mubr.f32.gmra.mrb[0].mxu0 %v48
    %v161 = vpop.f32.mrb[0].mxu0
    %v162 = vadd.f32 %v44, %v161
    %v163 = vpop.f32.mrb[0].mxu0
    %164 = vmatprep.mubr.f32.mxu0 0.0
    %165 = vmatmul.mubr.f32.gmra.mrb[0].mxu0 %v51
    %v166 = vpop.f32.mrb[0].mxu0
    %v167 = vadd.f32 %v44, %v166
    %v168 = vpop.f32.mrb[0].mxu0
    %169 = vmatprep.mubr.f32.mxu0 0.0
    %170 = vmatmul.mubr.f32.gmra.mrb[0].mxu0 %v54
    %v171 = vpop.f32.mrb[0].mxu0
    %v172 = vadd.f32 %v44, %v171
    %v173 = vpop.f32.mrb[0].mxu0
    %174 = vmatprep.mubr.f32.mxu0 0.0
    %175 = vmatmul.mubr.f32.gmra.mrb[0].mxu0 %v57
    %v176 = vpop.f32.mrb[0].mxu0
    %v177 = vadd.f32 %v44, %v176
    %v178 = vpop.f32.mrb[0].mxu0
    %179 = vmatprep.mubr.f32.mxu0 0.0
    %180 = vmatmul.mubr.f32.gmra.mrb[0].mxu0 %v60
    %v181 = vpop.f32.mrb[0].mxu0
    %v182 = vadd.f32 %v44, %v181
    %v183 = vpop.f32.mrb[0].mxu0
    %184 = vmatprep.mubr.f32.mxu0 0.0
    %185 = vmatmul.mubr.f32.gmra.mrb[0].mxu0 %v63
    %v186 = vpop.f32.mrb[0].mxu0
    %v187 = vadd.f32 %v44, %v186
    %v188 = vpop.f32.mrb[0].mxu0
    %189 = vmatprep.mubr.f32.mxu0 0.0
    %190 = vmatmul.mubr.f32.gmra.mrb[0].mxu0 %v66
    %v191 = vpop.f32.mrb[0].mxu0
    %v192 = vadd.f32 %v44, %v191
    %v193 = vpop.f32.mrb[0].mxu0
    %194 = vmatprep.mubr.f32.mxu0 0.0
    %195 = vmatmul.mubr.f32.gmra.mrb[0].mxu0 %v69
    %v196 = vpop.f32.mrb[0].mxu0
    %v197 = vadd.f32 %v44, %v196
    %v198 = vpop.f32.mrb[0].mxu0
    %199 = vmatprep.mubr.f32.mxu0 0.0
    %200 = vmatmul.mubr.f32.gmra.mrb[0].mxu0 %v72
    %v201 = vpop.f32.mrb[0].mxu0
    %v202 = vadd.f32 %v44, %v201
    %v203 = vpop.f32.mrb[0].mxu0
    %204 = vmatprep.mubr.f32.mxu0 0.0
    %205 = vmatmul.mubr.f32.gmra.mrb[0].mxu0 %v75
    %v206 = vpop.f32.mrb[0].mxu0
    %v207 = vadd.f32 %v44, %v206
    %v208 = vpop.f32.mrb[0].mxu0
    %209 = vmatprep.mubr.f32.mxu0 0.0
    %210 = vmatmul.mubr.f32.gmra.mrb[0].mxu0 %v78
    %v211 = vpop.f32.mrb[0].mxu0
    %v212 = vadd.f32 %v44, %v211
    %v213 = vpop.f32.mrb[0].mxu0
    %214 = vmatprep.mubr.f32.mxu0 0.0
    %215 = vmatmul.mubr.f32.gmra.mrb[0].mxu0 %v81
    %v216 = vpop.f32.mrb[0].mxu0
    %v217 = vadd.f32 %v44, %v216
    %v218 = vpop.f32.mrb[0].mxu0
    %219 = vmatprep.mubr.f32.mxu0 0.0
    %220 = vmatmul.mubr.f32.gmra.mrb[0].mxu0 %v84
    %v221 = vpop.f32.mrb[0].mxu0
    %v222 = vadd.f32 %v44, %v221
    %v223 = vpop.f32.mrb[0].mxu0
    %224 = vmatprep.mubr.f32.mxu0 0.0
    %225 = vmatmul.mubr.f32.gmra.mrb[0].mxu0 %v87
    %v226 = vpop.f32.mrb[0].mxu0
    %v227 = vadd.f32 %v44, %v226
    %v228 = vpop.f32.mrb[0].mxu0
    %229 = vmatprep.mubr.f32.mxu0 0.0
    %230 = vmatmul.mubr.f32.gmra.mrb[0].mxu0 %v90
    %v231 = vpop.f32.mrb[0].mxu0
    %v232 = vadd.f32 %v44, %v231
    %v233 = vpop.f32.mrb[0].mxu0
    %234 = vmatprep.mubr.f32.mxu0 0.0
    %235 = vmatmul.mubr.f32.gmra.mrb[0].mxu0 %v93
    %v236 = vpop.f32.mrb[0].mxu0
    %v237 = vadd.f32 %v44, %v236
    %v238 = vpop.f32.mrb[0].mxu0
    %239 = vdwg.mxu0
    %v240 = vmax.f32 %v162, 0.0
    %v241 = vmax.f32 %v167, 0.0
    %v242 = vmax.f32 %v172, 0.0
    %v243 = vmax.f32 %v177, 0.0
    %v244 = vmax.f32 %v182, 0.0
    %v245 = vmax.f32 %v187, 0.0
    %v246 = vmax.f32 %v192, 0.0
    %v247 = vmax.f32 %v197, 0.0
    %v248 = vmax.f32 %v202, 0.0
    %v249 = vmax.f32 %v207, 0.0
    %v250 = vmax.f32 %v212, 0.0
    %v251 = vmax.f32 %v217, 0.0
    %v252 = vmax.f32 %v222, 0.0
    %v253 = vmax.f32 %v227, 0.0
    %v254 = vmax.f32 %v232, 0.0
    %v255 = vmax.f32 %v237, 0.0
    %v256 = vld [vmem:[%s3] sm:$0x1]
    %s257 = sld [smem:[#allocation2]]
    %v258 = vstv %s257
    %259 = vmatprep.subr.mxu0 0.0
    %260 = vmatpush1.xpose.msra.mxu0 %v240
    %261 = vmatprep.subr.mxu0 0.0
    %262 = vmatpush1.xpose.msra.mxu0 %v241
    %263 = vmatprep.subr.mxu0 0.0
    %264 = vmatpush1.xpose.msra.mxu0 %v242
    %265 = vmatprep.subr.mxu0 0.0
    %266 = vmatpush1.xpose.msra.mxu0 %v243
    %267 = vmatprep.subr.mxu0 0.0
    %268 = vmatpush1.xpose.msra.mxu0 %v244
    %269 = vmatprep.subr.mxu0 0.0
    %270 = vmatpush1.xpose.msra.mxu0 %v245
    %271 = vmatprep.subr.mxu0 0.0
    %272 = vmatpush1.xpose.msra.mxu0 %v246
    %273 = vmatprep.subr.mxu0 0.0
    %274 = vmatpush1.xpose.msra.mxu0 %v247
    %275 = vmatprep.subr.mxu0 0.0
    %276 = vmatpush1.xpose.msra.mxu0 %v248
    %277 = vmatprep.subr.mxu0 0.0
    %278 = vmatpush1.xpose.msra.mxu0 %v249
    %279 = vmatprep.subr.mxu0 0.0
    %280 = vmatpush1.xpose.msra.mxu0 %v250
    %281 = vmatprep.subr.mxu0 0.0
    %282 = vmatpush1.xpose.msra.mxu0 %v251
    %283 = vmatprep.subr.mxu0 0.0
    %284 = vmatpush1.xpose.msra.mxu0 %v252
    %285 = vmatprep.subr.mxu0 0.0
    %286 = vmatpush1.xpose.msra.mxu0 %v253
    %287 = vmatprep.subr.mxu0 0.0
    %288 = vmatpush1.xpose.msra.mxu0 %v254
    %289 = vmatprep.subr.mxu0 0.0
    %290 = vmatpush1.xpose.msra.mxu0 %v255
    %291 = vmatprep.subr.mxu0 0.0
    %292 = vmatpush1.xpose.msra.mxu0 0.0
    %293 = vmatprep.subr.mxu0 0.0
    %294 = vmatpush1.xpose.msra.mxu0 0.0
    %295 = vmatprep.subr.mxu0 0.0
    %296 = vmatpush1.xpose.msra.mxu0 0.0
    %297 = vmatprep.subr.mxu0 0.0
    %298 = vmatpush1.xpose.msra.mxu0 0.0
    %299 = vmatprep.subr.mxu0 0.0
    %300 = vmatpush1.xpose.msra.mxu0 0.0
    %301 = vmatprep.subr.mxu0 0.0
    %302 = vmatpush1.xpose.msra.mxu0 0.0
    %303 = vmatprep.subr.mxu0 0.0
    %304 = vmatpush1.xpose.msra.mxu0 0.0
    %305 = vmatprep.subr.mxu0 0.0
    %306 = vmatpush1.xpose.msra.mxu0 0.0
    %307 = vmatprep.subr.mxu0 0.0
    %308 = vmatpush1.xpose.msra.mxu0 0.0
    %309 = vmatprep.subr.mxu0 0.0
    %310 = vmatpush1.xpose.msra.mxu0 0.0
    %311 = vmatprep.subr.mxu0 0.0
    %312 = vmatpush1.xpose.msra.mxu0 0.0
    %313 = vmatprep.subr.mxu0 0.0
    %314 = vmatpush1.xpose.msra.mxu0 0.0
    %315 = vmatprep.subr.mxu0 0.0
    %316 = vmatpush1.xpose.msra.mxu0 0.0
    %317 = vmatprep.subr.mxu0 0.0
    %318 = vmatpush1.xpose.msra.mxu0 0.0
    %319 = vmatprep.subr.mxu0 0.0
    %320 = vmatpush1.xpose.msra.mxu0 0.0
    %321 = vmatprep.subr.mxu0 0.0
    %322 = vmatpush1.xpose.msra.mxu0 0.0
    %323 = vmatprep.mubr.f32.mxu0 0.0
    %324 = vmatmul.mubr.f32.gmra.mrb[0].mxu0 %v256
    %v325 = vpop.f32.mrb[0].mxu0
    %v326 = vadd.f32 %v258, %v325
    %v327 = vpop.f32.mrb[0].mxu0
    %328 = vdwg.mxu0
    %329 = vst [vmem:[#allocation3] sm:$0x1] %v326
    // Predicated region
    $region22: #{tpu_custom_call.1} parent=1 // pred_check
      _
    $region23: #{tpu_custom_call.1} parent=1 // pred_check_branch
      %331 = sbr.rel (0) target = $region25
    $region24: #{tpu_custom_call.1} parent=1 // pred_region
      %s333 = ssub.s32 16, 16
      %334 = vsyncadd [#allocation4], %s333
      %s336 = sshll.u32 [#allocation3], 4
      %s337 = int_to_ptr.vmem [resolvable:$true] %s336
      %339 = dma.vmem_to_hbm [thread:$0]  %s337, 16, %s5, [#allocation4]
    $region25: #{tpu_custom_call.1} parent=1 // pred_fallthru
      _
    // Predicated region
    $region26: #{tpu_custom_call.1} parent=1 // pred_check
      _
    $region27: #{tpu_custom_call.1} parent=1 // pred_check_branch
      %341 = sbr.rel (0) target = $region29
    $region28: #{tpu_custom_call.1} parent=1 // pred_region
      %342 = dma.done [#allocation4], 16
    $region29: #{tpu_custom_call.1} parent=1 // pred_fallthru
      _
    %343 = vsyncpa [#allocation4], 1

</llo_original>
